<compile_context>
chip_gen: v5e
topology: v5e:2x2
jax: 0.10.0
libtpu: 0.0.40
codegen_flags: <defaults>
</compile_context>

<pallas_src>
import functools

import jax
import jax.numpy as jnp
from jax.experimental import pallas as pl
from jax.experimental.pallas import tpu as pltpu


def _round_up(x, m):
    return (x + m - 1) // m * m


def _macro_precision_kernel(logits_ref, targets_ref, tp_ref, pp_ref, *,
                            n_classes, n_valid, block_rows, blocks_per_split):
    split = pl.program_id(0)
    blk = pl.program_id(1)

    # Output refs double as per-split accumulators (resident in VMEM across the
    # 'arbitrary' block axis); zero them at the first block of each split.
    @pl.when(blk == 0)
    def _init():
        tp_ref[...] = jnp.zeros_like(tp_ref)
        pp_ref[...] = jnp.zeros_like(pp_ref)

    # Native-dtype argmax (no f32 upcast): equality against the row max is
    # exact in the input dtype; halves the live tile bytes for bf16 logits.
    logits = logits_ref[...]                                    # (TM, C)
    tm, c = logits.shape
    col = jax.lax.broadcasted_iota(jnp.int32, (tm, c), 1)
    row_max = jnp.max(logits, axis=-1, keepdims=True)
    pred = jnp.min(jnp.where(logits == row_max, col, jnp.int32(c)),
                   axis=-1, keepdims=True)                      # (TM,1) first max

    # Row-validity mask for the padded tail block.
    row0 = (split * blocks_per_split + blk) * block_rows
    row_id = row0 + jax.lax.broadcasted_iota(jnp.int32, (tm, 1), 0)
    valid = row_id < n_valid                                    # (TM, 1)

    # Predicted one-hot in bf16 (values are exact 0/1): native MXU input dtype
    # on all generations; padded rows contribute nothing.
    cls = jax.lax.broadcasted_iota(jnp.int32, (tm, n_classes), 1)
    pred_oh = jnp.where((pred == cls) & valid, 1.0, 0.0).astype(jnp.bfloat16)

    # Fused LHS: rows 0..nc-1 = target one-hots (classes on sublanes, rows on
    # lanes, built straight from the lane-dense targets -> no relayout); row nc
    # = all-ones.  A single MXU matmul then yields the confusion matrix and the
    # predicted-positive counts together.
    targets = targets_ref[0]                                    # (1, TM) int32
    cls_row = jax.lax.broadcasted_iota(jnp.int32, (n_classes + 1, tm), 0)
    lhs = jnp.where((cls_row == targets) | (cls_row == n_classes),
                    1.0, 0.0).astype(jnp.bfloat16)              # (nc+1, TM)

    cm = jnp.dot(lhs, pred_oh, preferred_element_type=jnp.float32)  # (nc+1, nc)
    eye = (jax.lax.broadcasted_iota(jnp.int32, (n_classes + 1, n_classes), 0) ==
           jax.lax.broadcasted_iota(jnp.int32, (n_classes + 1, n_classes), 1))
    tp_blk = jnp.sum(jnp.where(eye, cm, 0.0), axis=0, keepdims=True)  # (1, nc)
    pp_blk = cm[n_classes:n_classes + 1, :]                           # (1, nc)

    # int32 accumulation keeps per-class counts exact up to 2^31 samples.
    tp_ref[...] += tp_blk.astype(jnp.int32)
    pp_ref[...] += pp_blk.astype(jnp.int32)


def macro_precision_metric(predicted_logits, true_targets, n_classes=2,
                           block_rows=None):
    C = predicted_logits.shape[-1]
    logits = predicted_logits.reshape(-1, C)                    # keep native dtype
    targets = true_targets.reshape(-1).astype(jnp.int32)
    n = logits.shape[0]
    itemsize = jnp.dtype(logits.dtype).itemsize

    # Generation-aware VMEM budget (v7x: 64 MiB physical, v5e/v6e: 128 MiB).
    try:
        vmem_cap = int(pltpu.get_tpu_info().vmem_capacity_bytes)
    except Exception:
        vmem_cap = 64 * 1024 * 1024
    vmem_limit = int(min(vmem_cap * 5 // 8, 80 * 1024 * 1024))

    # Row-tile sizing: as large as the budget allows.  Per-row VMEM cost =
    # double-buffered lane-padded logits tile + argmax int32 temporaries
    # (col iota / where result) + bf16 pred one-hot + targets.
    lane = 128
    sub = max(8, 8 * (4 // max(1, itemsize)))        # 8/16/32 for 32/16/8-bit
    c_pad = _round_up(C, lane)
    nc_pad = _round_up(max(n_classes, 1), lane)
    per_row = c_pad * (2 * itemsize + 3 * 4) + nc_pad * 2 + 2 * 4
    if block_rows is None:
        tm_cap = max(sub, (vmem_limit // 2 // per_row) // sub * sub)
        if tm_cap >= lane:
            tm_cap = tm_cap // lane * lane           # lane-dense targets blocks
        tm = min(tm_cap, 32768, _round_up(n, sub))
    else:
        tm = _round_up(block_rows, sub)              # testing / manual override

    # Split the row range across (up to two) TensorCores: leading 'parallel'
    # grid axis, per-split partial counts combined in the wrapper below.
    num_splits = 2 if n > tm else 1
    n_pad = _round_up(n, tm * num_splits)
    if n_pad != n:
        logits = jnp.pad(logits, ((0, n_pad - n), (0, 0)))
        targets = jnp.pad(targets, (0, n_pad - n))
    num_blocks = n_pad // tm
    blocks_per_split = num_blocks // num_splits
    targets_ld = targets.reshape(num_blocks, 1, tm)             # lane-dense layout

    kernel = functools.partial(
        _macro_precision_kernel, n_classes=n_classes, n_valid=n,
        block_rows=tm, blocks_per_split=blocks_per_split)

    # TODO(synk): for small C the (N, C) HBM layout is lane-padded to 128, so
    # reads are ~128/C x amplified; packing 128//C rows per physical row only
    # pays off if fused into the logits producer (a wrapper-side reshape would
    # itself be a relayout copy), so it is not attempted here.
    tp_parts, pp_parts = pl.pallas_call(
        kernel,
        out_shape=(
            jax.ShapeDtypeStruct((num_splits, 1, n_classes), jnp.int32),
            jax.ShapeDtypeStruct((num_splits, 1, n_classes), jnp.int32),
        ),
        grid_spec=pltpu.PrefetchScalarGridSpec(
            num_scalar_prefetch=0,
            grid=(num_splits, blocks_per_split),
            in_specs=[
                pl.BlockSpec((tm, C),
                             lambda s, i: (s * blocks_per_split + i, 0)),
                pl.BlockSpec((1, 1, tm),
                             lambda s, i: (s * blocks_per_split + i, 0, 0)),
            ],
            out_specs=[
                pl.BlockSpec((None, 1, n_classes), lambda s, i: (s, 0, 0)),
                pl.BlockSpec((None, 1, n_classes), lambda s, i: (s, 0, 0)),
            ],
        ),
        compiler_params=pltpu.CompilerParams(
            dimension_semantics=("parallel", "arbitrary"),
            vmem_limit_bytes=vmem_limit,
        ),
    )(logits, targets_ld)

    # Combine per-split partials; _safe_div + macro mean in the wrapper.
    tp = tp_parts.reshape(num_splits, n_classes).sum(axis=0).astype(jnp.float32)
    pp = pp_parts.reshape(num_splits, n_classes).sum(axis=0).astype(jnp.float32)
    prec = jnp.where(pp == 0.0, jnp.zeros_like(tp), tp / pp)
    return jnp.mean(prec)


def _reference(predicted_logits, true_targets, n_classes):
    # pure-JAX reference mirroring the PyTorch module
    pred = jnp.argmax(predicted_logits, axis=-1).reshape(-1)
    true = true_targets.reshape(-1)
    precs = []
    for c in range(n_classes):
        tp = jnp.sum(((pred == c) & (true == c)).astype(jnp.float32))
        fp = jnp.sum(((pred == c) & (true != c)).astype(jnp.float32))
        den = tp + fp
        precs.append(jnp.where(den == 0, 0.0, tp / den))
    return jnp.mean(jnp.stack(precs))


if __name__ == "__main__":
    key = jax.random.PRNGKey(0)
    k1, k2, k3, k4 = jax.random.split(key, 4)

    # Small smoke test (single block, single split).
    B, S, n_classes = 2, 8, 4
    predicted_logits = jax.random.normal(k1, (B, S, n_classes), jnp.float32)
    true_targets = jax.random.randint(k2, (B, S), 0, n_classes, dtype=jnp.int32)
    result = jax.block_until_ready(
        macro_precision_metric(predicted_logits, true_targets, n_classes=n_classes))
    expected = _reference(predicted_logits, true_targets, n_classes)
    assert jnp.allclose(result, expected, atol=1e-6), (result, expected)

    # Multi-block / two-split path (forced tiny tile) to exercise accumulation,
    # tail-row masking and the parallel row split.
    n_rows = 66
    logits_big = jax.random.normal(k3, (n_rows, n_classes), jnp.float32)
    targets_big = jax.random.randint(k4, (n_rows,), 0, n_classes, dtype=jnp.int32)
    result_big = jax.block_until_ready(
        macro_precision_metric(logits_big, targets_big, n_classes=n_classes,
                               block_rows=8))
    expected_big = _reference(logits_big, targets_big, n_classes)
    assert jnp.allclose(result_big, expected_big, atol=1e-6), (result_big, expected_big)

    print("KERNEL_OK")
</pallas_src>

<mosaic_0001>
module attributes {stable_mosaic.version = 11 : i64} {
  func.func @_macro_precision_kernel(%arg0: i32, %arg1: i32, %arg2: memref<16x4xf32, #tpu.memory_space<vmem>>, %arg3: memref<1x1x16xi32, #tpu.memory_space<vmem>>, %arg4: memref<1x1x4xi32, #tpu.memory_space<vmem>>, %arg5: memref<1x1x4xi32, #tpu.memory_space<vmem>>) attributes {dimension_semantics = [#tpu.dimension_semantics<parallel>, #tpu.dimension_semantics<arbitrary>], iteration_bounds = array<i64: 1, 1>, scalar_prefetch = 0 : i64, scratch_operands = 0 : i64, tpu.core_type = #tpu.core_type<tc>, window_params = [{transform_indices = @transform_0, window_bounds = array<i64: 16, 4>}, {transform_indices = @transform_1, window_bounds = array<i64: 1, 1, 16>}, {transform_indices = @transform_2, window_bounds = array<i64: 1, 1, 4>}, {transform_indices = @transform_3, window_bounds = array<i64: 1, 1, 4>}]} {
    %c0_i32 = arith.constant 0 : i32
    %0 = arith.cmpi eq, %arg1, %c0_i32 : i32
    %1 = arith.extui %0 : i1 to i32
    %c0_i32_0 = arith.constant 0 : i32
    %2 = arith.cmpi ne, %1, %c0_i32_0 : i32
    scf.if %2 {
      %c0_i32_27 = arith.constant 0 : i32
      %65 = vector.broadcast %c0_i32_27 : i32 to vector<1x4xi32>
      %c0_28 = arith.constant 0 : index
      %c0_29 = arith.constant 0 : index
      %c0_30 = arith.constant 0 : index
      %66 = vector.load %arg4[%c0_28, %c0_29, %c0_30] : memref<1x1x4xi32, #tpu.memory_space<vmem>>, vector<1x1x4xi32>
      %67 = vector.shape_cast %66 : vector<1x1x4xi32> to vector<1x4xi32>
      %68 = vector.shape_cast %65 : vector<1x4xi32> to vector<1x1x4xi32>
      tpu.vector_store %arg4[%c0_28, %c0_29, %c0_30], %68 {strides = array<i32>} : memref<1x1x4xi32, #tpu.memory_space<vmem>>, vector<1x1x4xi32>,
      %c0_i32_31 = arith.constant 0 : i32
      %69 = vector.broadcast %c0_i32_31 : i32 to vector<1x4xi32>
      %c0_32 = arith.constant 0 : index
      %c0_33 = arith.constant 0 : index
      %c0_34 = arith.constant 0 : index
      %70 = vector.load %arg5[%c0_32, %c0_33, %c0_34] : memref<1x1x4xi32, #tpu.memory_space<vmem>>, vector<1x1x4xi32>
      %71 = vector.shape_cast %70 : vector<1x1x4xi32> to vector<1x4xi32>
      %72 = vector.shape_cast %69 : vector<1x4xi32> to vector<1x1x4xi32>
      tpu.vector_store %arg5[%c0_32, %c0_33, %c0_34], %72 {strides = array<i32>} : memref<1x1x4xi32, #tpu.memory_space<vmem>>, vector<1x1x4xi32>,
    } else {
    }
    %c0 = arith.constant 0 : index
    %c0_1 = arith.constant 0 : index
    %3 = vector.load %arg2[%c0, %c0_1] : memref<16x4xf32, #tpu.memory_space<vmem>>, vector<16x4xf32>
    %4 = tpu.iota {dimensions = array<i32: 1>} : vector<16x4xi32>
    %cst = arith.constant dense<0xFF800000> : vector<16xf32>
    %5 = vector.multi_reduction <maximumf>, %3, %cst [1] : vector<16x4xf32> to vector<16xf32>
    %6 = vector.shape_cast %5 : vector<16xf32> to vector<16x1xf32>
    %7 = vector.broadcast %6 : vector<16x1xf32> to vector<16x4xf32>
    %8 = arith.cmpf oeq, %3, %7 : vector<16x4xf32>
    %c4_i32 = arith.constant 4 : i32
    %9 = vector.broadcast %c4_i32 : i32 to vector<16x4xi32>
    %10 = arith.select %8, %4, %9 : vector<16x4xi1>, vector<16x4xi32>
    %cst_2 = arith.constant dense<2147483647> : vector<16xi32>
    %11 = vector.multi_reduction <minsi>, %10, %cst_2 [1] : vector<16x4xi32> to vector<16xi32>
    %12 = vector.shape_cast %11 : vector<16xi32> to vector<16x1xi32>
    %c1_i32 = arith.constant 1 : i32
    %13 = arith.muli %arg0, %c1_i32 : i32
    %14 = arith.addi %13, %arg1 : i32
    %c16_i32 = arith.constant 16 : i32
    %15 = arith.muli %14, %c16_i32 : i32
    %16 = tpu.iota {dimensions = array<i32: 0>} : vector<16x1xi32>
    %17 = vector.broadcast %15 : i32 to vector<16x1xi32>
    %18 = arith.addi %17, %16 : vector<16x1xi32>
    %c16_i32_3 = arith.constant 16 : i32
    %19 = vector.broadcast %c16_i32_3 : i32 to vector<16x1xi32>
    %20 = arith.cmpi slt, %18, %19 : vector<16x1xi32>
    %21 = tpu.iota {dimensions = array<i32: 1>} : vector<16x4xi32>
    %22 = vector.broadcast %12 : vector<16x1xi32> to vector<16x4xi32>
    %23 = arith.cmpi eq, %22, %21 : vector<16x4xi32>
    %24 = vector.broadcast %20 : vector<16x1xi1> to vector<16x4xi1>
    %25 = arith.andi %23, %24 : vector<16x4xi1>
    %cst_4 = arith.constant 1.000000e+00 : f32
    %cst_5 = arith.constant 0.000000e+00 : f32
    %26 = vector.broadcast %cst_4 : f32 to vector<16x4xf32>
    %27 = vector.broadcast %cst_5 : f32 to vector<16x4xf32>
    %28 = arith.select %25, %26, %27 : vector<16x4xi1>, vector<16x4xf32>
    %29 = arith.truncf %28 : vector<16x4xf32> to vector<16x4xbf16>
    %c0_6 = arith.constant 0 : index
    %c0_7 = arith.constant 0 : index
    %c0_8 = arith.constant 0 : index
    %30 = vector.load %arg3[%c0_6, %c0_7, %c0_8] : memref<1x1x16xi32, #tpu.memory_space<vmem>>, vector<1x1x16xi32>
    %31 = vector.shape_cast %30 : vector<1x1x16xi32> to vector<1x16xi32>
    %32 = tpu.iota {dimensions = array<i32: 0>} : vector<5x16xi32>
    %33 = vector.broadcast %31 : vector<1x16xi32> to vector<5x16xi32>
    %34 = arith.cmpi eq, %32, %33 : vector<5x16xi32>
    %c4_i32_9 = arith.constant 4 : i32
    %35 = vector.broadcast %c4_i32_9 : i32 to vector<5x16xi32>
    %36 = arith.cmpi eq, %32, %35 : vector<5x16xi32>
    %37 = arith.ori %34, %36 : vector<5x16xi1>
    %cst_10 = arith.constant 1.000000e+00 : f32
    %cst_11 = arith.constant 0.000000e+00 : f32
    %38 = vector.broadcast %cst_10 : f32 to vector<5x16xf32>
    %39 = vector.broadcast %cst_11 : f32 to vector<5x16xf32>
    %40 = arith.select %37, %38, %39 : vector<5x16xi1>, vector<5x16xf32>
    %41 = arith.truncf %40 : vector<5x16xf32> to vector<5x16xbf16>
    %cst_12 = arith.constant dense<0.000000e+00> : vector<5x4xf32>
    %42 = tpu.matmul %41, %29, %cst_12 {dimension_numbers = #tpu.dot_dimension_numbers<[1], [0], [0], [1], [0, 0, 1, 1], [], []>} : vector<5x16xbf16>, vector<16x4xbf16>, vector<5x4xf32> -> vector<5x4xf32>
    %43 = tpu.iota {dimensions = array<i32: 0>} : vector<5x4xi32>
    %44 = tpu.iota {dimensions = array<i32: 1>} : vector<5x4xi32>
    %45 = arith.cmpi eq, %43, %44 : vector<5x4xi32>
    %cst_13 = arith.constant 0.000000e+00 : f32
    %46 = vector.broadcast %cst_13 : f32 to vector<5x4xf32>
    %47 = arith.select %45, %42, %46 : vector<5x4xi1>, vector<5x4xf32>
    %cst_14 = arith.constant dense<0.000000e+00> : vector<4xf32>
    %48 = vector.multi_reduction <add>, %47, %cst_14 [0] : vector<5x4xf32> to vector<4xf32>
    %49 = vector.shape_cast %48 : vector<4xf32> to vector<1x4xf32>
    %50 = vector.extract_strided_slice %42 {offsets = [4, 0], sizes = [1, 4], strides = [1, 1]} : vector<5x4xf32> to vector<1x4xf32>
    %c0_15 = arith.constant 0 : index
    %c0_16 = arith.constant 0 : index
    %c0_17 = arith.constant 0 : index
    %51 = vector.load %arg4[%c0_15, %c0_16, %c0_17] : memref<1x1x4xi32, #tpu.memory_space<vmem>>, vector<1x1x4xi32>
    %52 = vector.shape_cast %51 : vector<1x1x4xi32> to vector<1x4xi32>
    %53 = arith.fptosi %49 : vector<1x4xf32> to vector<1x4xi32>
    %54 = arith.addi %52, %53 : vector<1x4xi32>
    %c0_18 = arith.constant 0 : index
    %c0_19 = arith.constant 0 : index
    %c0_20 = arith.constant 0 : index
    %55 = vector.load %arg4[%c0_18, %c0_19, %c0_20] : memref<1x1x4xi32, #tpu.memory_space<vmem>>, vector<1x1x4xi32>
    %56 = vector.shape_cast %55 : vector<1x1x4xi32> to vector<1x4xi32>
    %57 = vector.shape_cast %54 : vector<1x4xi32> to vector<1x1x4xi32>
    tpu.vector_store %arg4[%c0_18, %c0_19, %c0_20], %57 {strides = array<i32>} : memref<1x1x4xi32, #tpu.memory_space<vmem>>, vector<1x1x4xi32>,
    %c0_21 = arith.constant 0 : index
    %c0_22 = arith.constant 0 : index
    %c0_23 = arith.constant 0 : index
    %58 = vector.load %arg5[%c0_21, %c0_22, %c0_23] : memref<1x1x4xi32, #tpu.memory_space<vmem>>, vector<1x1x4xi32>
    %59 = vector.shape_cast %58 : vector<1x1x4xi32> to vector<1x4xi32>
    %60 = arith.fptosi %50 : vector<1x4xf32> to vector<1x4xi32>
    %61 = arith.addi %59, %60 : vector<1x4xi32>
    %c0_24 = arith.constant 0 : index
    %c0_25 = arith.constant 0 : index
    %c0_26 = arith.constant 0 : index
    %62 = vector.load %arg5[%c0_24, %c0_25, %c0_26] : memref<1x1x4xi32, #tpu.memory_space<vmem>>, vector<1x1x4xi32>
    %63 = vector.shape_cast %62 : vector<1x1x4xi32> to vector<1x4xi32>
    %64 = vector.shape_cast %61 : vector<1x4xi32> to vector<1x1x4xi32>
    tpu.vector_store %arg5[%c0_24, %c0_25, %c0_26], %64 {strides = array<i32>} : memref<1x1x4xi32, #tpu.memory_space<vmem>>, vector<1x1x4xi32>,
    return
  }
  func.func @transform_0(%arg0: i32, %arg1: i32) -> (i32, i32) {
    %c1_i32 = arith.constant 1 : i32
    %0 = arith.muli %arg0, %c1_i32 : i32
    %1 = arith.addi %0, %arg1 : i32
    %c0_i32 = arith.constant 0 : i32
    %c0_i32_0 = arith.constant 0 : i32
    return %1, %c0_i32 : i32, i32
  }
  func.func @transform_1(%arg0: i32, %arg1: i32) -> (i32, i32, i32) {
    %c1_i32 = arith.constant 1 : i32
    %0 = arith.muli %arg0, %c1_i32 : i32
    %1 = arith.addi %0, %arg1 : i32
    %c0_i32 = arith.constant 0 : i32
    %c0_i32_0 = arith.constant 0 : i32
    %c0_i32_1 = arith.constant 0 : i32
    return %1, %c0_i32, %c0_i32_0 : i32, i32, i32
  }
  func.func @transform_2(%arg0: i32, %arg1: i32) -> (i32, i32, i32) {
    %c0_i32 = arith.constant 0 : i32
    %c0_i32_0 = arith.constant 0 : i32
    %c0_i32_1 = arith.constant 0 : i32
    return %arg0, %c0_i32, %c0_i32_0 : i32, i32, i32
  }
  func.func @transform_3(%arg0: i32, %arg1: i32) -> (i32, i32, i32) {
    %c0_i32 = arith.constant 0 : i32
    %c0_i32_0 = arith.constant 0 : i32
    %c0_i32_1 = arith.constant 0 : i32
    return %arg0, %c0_i32, %c0_i32_0 : i32, i32, i32
  }
}

</mosaic_0001>

<llo_original>
// kernel: tpu_custom_call.1
$region0: #{tpu_custom_call.1}
  #allocation0 [shape = 'u32[]', space=smem, size = 0x4, offset = 0x4, fixed_abs, tag = 'smem constant byte address 0x4 - core index']
  #allocation1 [shape = 'u32[72,128]{1,0:T(1,128)}', space=vmem, size = 0x9000, scoped, tag = 'internal scratch']
  %s0 = inlined_call_operand.vmem [shape: f32[16,4], index: 0, kind: input, shape index: {}]
  %s1 = inlined_call_operand.vmem [shape: s32[1,1,16], index: 1, kind: input, shape index: {}]
  %s2 = inlined_call_operand.hbm [shape: s32[1,1,4], index: 2, kind: output, shape index: {0}]
  %s3 = inlined_call_operand.hbm [shape: s32[1,1,4], index: 3, kind: output, shape index: {1}]
  %4 = xla_tuple %s2, %s3
  %s5 = sld [smem:[#allocation0]]
  $region30: #{tpu_custom_call.1} parent=0
    _
  %s7 = ssub.s32 1, %s5
  %s8 = scalar_select 0, %s7, %s5
  $region1: #{tpu_custom_call.1} parent=0
    #allocation2 [shape = 'u8[512]{0}', space=vmem, size = 0x400, scoped, tag = 'output window, operand 0, single buffered']
    #allocation3 [shape = 's32[1]{0}', space=sflag, size = 0x4, scoped, tag = 'scoped memory for tpu_custom_call.1']
    #allocation4 [shape = 'u8[512]{0}', space=vmem, size = 0x400, scoped, tag = 'output window, operand 1, single buffered']
    #allocation5 [shape = 's32[1]{0}', space=sflag, size = 0x4, scoped, tag = 'scoped memory for tpu_custom_call.1']
    %9 = vsyncpa [#allocation3], 0
    %10 = vsyncpa [#allocation5], 0
    // Predicated region
    $region2: #{tpu_custom_call.1} parent=1 // pred_check
      _
    $region3: #{tpu_custom_call.1} parent=1 // pred_check_branch
      %12 = sbr.rel (0) target = $region5
    $region4: #{tpu_custom_call.1} parent=1 // pred_region
      %s13 = sadd.s32 0, 0
      %s14 = smul.u32 2, %s13
      %p15 = scmp.lt.s32.totalorder %s14, 1
      %s16 = scalar_select %p15, %s14, 1
      %s17 = smul.addr %s16, 8
      %s18 = scalar_lea.vmem %s0, %s17
      %s19 = sadd.s32 0, 0
      %s20 = smul.u32 2, %s19
    $region5: #{tpu_custom_call.1} parent=1 // pred_fallthru
      _
    // Predicated region
    $region6: #{tpu_custom_call.1} parent=1 // pred_check
      _
    $region7: #{tpu_custom_call.1} parent=1 // pred_check_branch
      %22 = sbr.rel (0) target = $region9
    $region8: #{tpu_custom_call.1} parent=1 // pred_region
      %s23 = sadd.s32 0, 0
      %p24 = scmp.lt.s32.totalorder %s23, 0
      %s25 = scalar_select %p24, %s23, 0
      %s26 = scalar_lea.vmem %s1, %s25
      %s27 = sadd.s32 0, 0
    $region9: #{tpu_custom_call.1} parent=1 // pred_fallthru
      _
    %s28 = sadd.s32 0, 0
    %s29 = smul.u32 2, %s28
    %p30 = scmp.lt.s32.totalorder %s29, 1
    %s31 = scalar_select %p30, %s29, 1
    %s32 = smul.addr %s31, 8
    %s33 = scalar_lea.vmem %s0, %s32
    %s34 = sadd.s32 0, 0
    %p35 = scmp.lt.s32.totalorder %s34, 0
    %s36 = scalar_select %p35, %s34, 0
    %s37 = scalar_lea.vmem %s1, %s36
    %s38 = sadd.s32 0, 0
    %s39 = smul.u32 2, %s38
    %p40 = scmp.lt.s32.totalorder %s39, 1
    %s41 = scalar_select %p40, %s39, 1
    %s42 = smul.addr %s41, 8
    %s43 = scalar_lea.vmem %s0, %s42
    %s44 = sadd.s32 0, 0
    %s45 = smul.u32 2, %s44
    %s46 = sadd.s32 0, 0
    %p47 = scmp.lt.s32.totalorder %s46, 0
    %s48 = scalar_select %p47, %s46, 0
    %s49 = scalar_lea.vmem %s1, %s48
    %s50 = sadd.s32 0, 0
    %p52 = scmp.eq.s32.totalorder 0, 0
    // Predicated region
    $region10: #{tpu_custom_call.1} parent=1 // pred_check
      %p53 = pneg %p52
    $region11: #{tpu_custom_call.1} parent=1 // pred_check_branch
      %55 = sbr.rel (%p53) target = $region13
    $region12: #{tpu_custom_call.1} parent=1 // pred_region
      %vm56 = vcmask 24576
      %57 = vst.msk [vmem:[#allocation2] sm:$0x1] %vm56, 0
      %58 = vst.msk [vmem:[#allocation4] sm:$0x1] %vm56, 0
    $region13: #{tpu_custom_call.1} parent=1 // pred_fallthru
      _
    %v59 = vld [vmem:[%s43] sm:$0xff]
    %v60 = vld [vmem:[%s43 + $0x8] sm:$0xff]
    %v61 = vlaneseq
    %v62 = vand.u32 %v61, 127
    %vm63 = vcmask 31744
    %v64 = vsel %vm63, %v59, -inf
    %65 = vmax.xlane.f32.xlu0 %v64
    %v66 = vpop.xlane.xlu0 %65
    %v67 = vsel %vm63, %v60, -inf
    %68 = vmax.xlane.f32.xlu0 %v67
    %v69 = vpop.xlane.xlu0 %68
    %vm70 = vcmp.eq.f32.partialorder %v59, %v66
    %vm71 = vcmp.eq.f32.partialorder %v60, %v69
    %v72 = vsel %vm70, %v62, 4
    %v73 = vsel %vm71, %v62, 4
    %v74 = vsel %vm63, %v72, 2147483647
    %v75 = vand.u32 %v74, 65535
    %v76 = vshra.s32 %v74, 16
    %v77 = vcvt.s32.f32 %v75
    %v78 = vcvt.s32.f32 %v76
    %79 = vmin.xlane.f32.xlu0 %v78
    %v80 = vpop.xlane.xlu0 %79
    %vm81 = vcmp.eq.f32.partialorder %v78, %v80
    %v82 = vsel %vm81, %v77, inf
    %83 = vmin.xlane.f32.xlu0 %v82
    %v84 = vpop.xlane.xlu0 %83
    %v85 = vcvt.f32.s32 %v84
    %v86 = vcvt.f32.s32 %v80
    %v87 = vshll.u32 %v86, 16
    %v88 = vadd.s32 %v87, %v85
    %v89 = vsel %vm63, %v73, 2147483647
    %v90 = vand.u32 %v89, 65535
    %v91 = vshra.s32 %v89, 16
    %v92 = vcvt.s32.f32 %v90
    %v93 = vcvt.s32.f32 %v91
    %94 = vmin.xlane.f32.xlu0 %v93
    %v95 = vpop.xlane.xlu0 %94
    %vm96 = vcmp.eq.f32.partialorder %v93, %v95
    %v97 = vsel %vm96, %v92, inf
    %98 = vmin.xlane.f32.xlu0 %v97
    %v99 = vpop.xlane.xlu0 %98
    %v100 = vcvt.f32.s32 %v99
    %v101 = vcvt.f32.s32 %v95
    %v102 = vshll.u32 %v101, 16
    %v103 = vadd.s32 %v102, %v100
    %s104 = sadd.s32 0, 0
    %s105 = smul.u32 %s104, 16
    %v106 = vlaneseq
    %v107 = vshrl.u32 %v106, 7
    %v108 = vadd.s32 %v107, 8
    %v109 = vstv %s105
    %v110 = vadd.s32 %v109, %v107
    %v111 = vadd.s32 %v109, %v108
    %vm112 = vcmp.lt.s32.totalorder %v110, 16
    %vm113 = vcmp.lt.s32.totalorder %v111, 16
    %vm114 = vcmp.eq.s32.totalorder %v88, %v62
    %vm115 = vcmp.eq.s32.totalorder %v103, %v62
    %v116 = vsel %vm112, 1, 0
    %v117 = vsel %vm113, 1, 0
    %vm118 = vcmp.eq.s32.totalorder %v116, 1
    %vm119 = vcmp.eq.s32.totalorder %v117, 1
    %vm120 = vmand %vm114, %vm118
    %vm121 = vmand %vm115, %vm119
    %v122 = vsel %vm120, 1.0, 0.0
    %v123 = vsel %vm121, 1.0, 0.0
    %v124 = vpack.c.bf16 %v123, %v122
    %v125 = vld [vmem:[%s49] sm:$0x1]
    %v126 = vperm.slane %v125, 0
    %vm127 = vcmp.eq.s32.totalorder %v107, %v126
    %vm128 = vcmp.eq.s32.totalorder %v107, 4
    %vm129 = vmor %vm127, %vm128
    %v130 = vsel %vm129, 1.0, 0.0
    %v131 = vpack.c.bf16 %v130, %v130
    %vm132 = vcmask 130048
    %v134 = vsel %vm132, %v131, 0
    %136 = vmatpush.bf16.msra.mxu0 0
    %137 = vmatpush.bf16.msra.mxu0 0
    %138 = vmatpush.bf16.msra.mxu0 0
    %139 = vmatpush.bf16.msra.mxu0 0
    %140 = vmatpush.bf16.msra.mxu0 0
    %141 = vmatpush.bf16.msra.mxu0 0
    %142 = vmatpush.bf16.msra.mxu0 0
    %143 = vmatpush.bf16.msra.mxu0 %v124
    %144 = vmatmul.bf16.gmra.mxu0 %v134
    %v145 = vpop.f32.mrf.mxu0
    %v146 = vadd.f32 0.0, %v145
    %v147 = vpop.f32.mrf.mxu0
    %148 = vdwg.mxu0
    %vm149 = vcmp.eq.s32.totalorder %v107, %v62
    %v150 = vsel %vm149, %v146, 0.0
    %vm151 = vcmask 28672
    %v152 = vsel %vm151, %v150, 0.0
    %v153 = vrot.slane %v152, 4
    %v154 = vadd.f32 %v152, %v153
    %v155 = vrot.slane %v154, 2
    %v156 = vadd.f32 %v154, %v155
    %v157 = vrot.slane %v156, 1
    %v158 = vadd.f32 %v156, %v157
    %v159 = vld [vmem:[#allocation2] sm:$0x1]
    %v160 = vcvt.f32.s32.to.zero.pseudo %v158
    %v161 = vadd.s32 %v159, %v160
    %vm162 = vcmask 24576
    %163 = vst.msk [vmem:[#allocation2] sm:$0x1] %vm162, %v161
    %v164 = vld [vmem:[#allocation4] sm:$0x1]
    %v165 = vcvt.f32.s32.to.zero.pseudo %v146
    %166 = vst [vmem:[#allocation1] sm:$0xff] %v165
    %s167 = scalar_lea.vmem [#allocation1], 4
    %v168 = vld [vmem:[%s167] ss:$9 sm:$0xff]
    %v169 = vadd.s32 %v164, %v168
    %170 = vst.msk [vmem:[#allocation4] sm:$0x1] %vm162, %v169
    // Predicated region
    $region14: #{tpu_custom_call.1} parent=1 // pred_check
      _
    $region15: #{tpu_custom_call.1} parent=1 // pred_check_branch
      %172 = sbr.rel (0) target = $region17
    $region16: #{tpu_custom_call.1} parent=1 // pred_region
      %174 = vsyncadd [#allocation3], 0
      %s176 = sshll.u32 [#allocation2], 4
      %s177 = int_to_ptr.vmem [resolvable:$true] %s176
      %s178 = sshll.u32 %s2, 4
      %s179 = int_to_ptr.hbm [resolvable:$true] %s178
      %181 = dma.vmem_to_hbm [thread:$0]  %s177, 16, %s179, [#allocation3]
    $region17: #{tpu_custom_call.1} parent=1 // pred_fallthru
      _
    // Predicated region
    $region18: #{tpu_custom_call.1} parent=1 // pred_check
      _
    $region19: #{tpu_custom_call.1} parent=1 // pred_check_branch
      %183 = sbr.rel (0) target = $region21
    $region20: #{tpu_custom_call.1} parent=1 // pred_region
      %185 = vsyncadd [#allocation5], 0
      %s187 = sshll.u32 [#allocation4], 4
      %s188 = int_to_ptr.vmem [resolvable:$true] %s187
      %s189 = sshll.u32 %s3, 4
      %s190 = int_to_ptr.hbm [resolvable:$true] %s189
      %192 = dma.vmem_to_hbm [thread:$0]  %s188, 16, %s190, [#allocation5]
    $region21: #{tpu_custom_call.1} parent=1 // pred_fallthru
      _
    // Predicated region
    $region22: #{tpu_custom_call.1} parent=1 // pred_check
      _
    $region23: #{tpu_custom_call.1} parent=1 // pred_check_branch
      %194 = sbr.rel (0) target = $region25
    $region24: #{tpu_custom_call.1} parent=1 // pred_region
      %196 = dma.done [#allocation3], 16
    $region25: #{tpu_custom_call.1} parent=1 // pred_fallthru
      _
    // Predicated region
    $region26: #{tpu_custom_call.1} parent=1 // pred_check
      _
    $region27: #{tpu_custom_call.1} parent=1 // pred_check_branch
      %198 = sbr.rel (0) target = $region29
    $region28: #{tpu_custom_call.1} parent=1 // pred_region
      %200 = dma.done [#allocation5], 16
    $region29: #{tpu_custom_call.1} parent=1 // pred_fallthru
      _
    %201 = vsyncpa [#allocation3], 1
    %202 = vsyncpa [#allocation5], 1

</llo_original>
